<compile_context>
chip_gen: v7x
topology: tpu7x:2x2x1
jax: 0.10.0
libtpu: 0.0.40
codegen_flags: <defaults>
</compile_context>

<pallas_src>
import functools

import jax
import jax.numpy as jnp
from jax.experimental import pallas as pl
from jax.experimental.pallas import tpu as pltpu

LANE = 128


def _round_up(n, m):
    return (n + m - 1) // m * m


def _vmem_spec():
    # whole array, auto-DMA'd into VMEM (gridless calls / broadcast operands)
    return pl.BlockSpec(memory_space=pltpu.MemorySpace.VMEM)


# ------------------------------------------------------------------ kernels --

def _conv_relu_gap_kernel(inv_hw, p_ref, w_ref, b_ref, o_ref):
    """One row tile of fused im2col-Conv3x3 + bias + ReLU + GAP partial sum.

    p: [tile, Kp]  lane-dense im2col patches (9*C zero-padded to 128 lanes)
    w: [Kp, Dp]    repacked conv weights (tap-major rows, zero-padded)
    b: [1, Dp]     o: [1, 1, Dp] per-batch pooled accumulator (f32, resident)
    """
    rt = pl.program_id(1)

    @pl.when(rt == 0)
    def _():
        o_ref[...] = jnp.zeros_like(o_ref)

    # ONE K=128 MXU matmul per tile (was 9 lane-sparse K=4 matmuls + slices).
    y = jnp.dot(p_ref[...], w_ref[...], preferred_element_type=jnp.float32)
    y = jnp.maximum(y + b_ref[...], 0.0)
    # GAP partial sum folded into the resident output block -> no [B*H*W, Dp]
    # activation ever held live across the grid (no vreg spills).
    o_ref[...] += jnp.sum(y, axis=0, keepdims=True)[None]

    @pl.when(rt == pl.num_programs(1) - 1)
    def _():
        o_ref[...] = o_ref[...] * inv_hw


def _transform_fused_kernel(n_src, n_tgt, eps,
                            rows_ref, wi_ref, vec_ref, wcat_ref, bcat_ref,
                            outcat_ref):
    """Entire transform() path in one program, 5 operands / 1 lane-dense output.

    rows: [n_src+n_tgt, F]  support rows then query rows (concatenated in wrapper)
    wi:   [F, M]            fc_transformer_in weight (one shared matmul)
    vec:  [5, M]            rows: fc_in_b, bn_src_g, bn_src_b, bn_tgt_g, bn_tgt_b
    wcat: [M, 2*NCp]        [fc_memory_w | fc_out_w], each zero-padded to 128
    bcat: [1, 2*NCp]        [fc_memory_b | fc_out_b]
    out:  [n_src+n_tgt, 2*NCp]   mem logits live in [:n_src, :NCp],
                                 out logits in [n_src:, NCp:]
    """
    T = rows_ref.shape[0]
    h = jnp.dot(rows_ref[...], wi_ref[...], preferred_element_type=jnp.float32)
    h = h + vec_ref[0:1, :]

    # bn_src / bn_tgt: training-mode (biased-variance) batch statistics over
    # each row group, computed with masks (no unaligned sublane value slices).
    is_src = jax.lax.broadcasted_iota(jnp.int32, (T, 1), 0) < n_src
    h_src = jnp.where(is_src, h, 0.0)
    h_tgt = jnp.where(is_src, 0.0, h)
    m_s = jnp.sum(h_src, axis=0, keepdims=True) * (1.0 / n_src)
    m_t = jnp.sum(h_tgt, axis=0, keepdims=True) * (1.0 / n_tgt)
    v_s = jnp.sum(jnp.where(is_src, (h - m_s) ** 2, 0.0),
                  axis=0, keepdims=True) * (1.0 / n_src)
    v_t = jnp.sum(jnp.where(is_src, 0.0, (h - m_t) ** 2),
                  axis=0, keepdims=True) * (1.0 / n_tgt)
    norm_s = (h - m_s) * jax.lax.rsqrt(v_s + eps) * vec_ref[1:2, :] + vec_ref[2:3, :]
    norm_t = (h - m_t) * jax.lax.rsqrt(v_t + eps) * vec_ref[3:4, :] + vec_ref[4:5, :]
    normed = jnp.where(is_src, norm_s, norm_t)

    # TODO(synk): the reference `Transformer` is an undefined external class
    # (returns (memory, output)); its body cannot be reproduced, so memory /
    # output fall through as the batch-normed src / tgt (tgt_mask unused).
    outcat_ref[...] = (
        jnp.dot(normed.astype(wcat_ref.dtype), wcat_ref[...],
                preferred_element_type=jnp.float32)
        + bcat_ref[...]).astype(outcat_ref.dtype)


# -------------------------------------------------------------------- model --

class FewShotTransformerPallas:
    """JAX/Pallas port of FewShotTransformer.

    forward(x) matches the PyTorch forward exactly: it is simply backbone(x).
    The backbone is injected in the reference, so here it is a deterministic
    Conv3x3(C -> backbone_output_dim) + ReLU + global-avg-pool fused kernel.
    Dropout is an inference no-op; ClassEncoding is constructed in the
    reference __init__ but never invoked in forward()/transform(), so omitted.
    BatchNorm uses training-mode batch statistics (biased variance).
    Set mxu_dtype=jnp.bfloat16 on v6e/v7x for native-rate MXU operands
    (accumulation stays f32); f32 default keeps the demo asserts tight.
    """

    def __init__(self, key, in_channels=4, backbone_output_dim=32, d_model=64,
                 max_classes=100, is_transductive=False,
                 mxu_dtype=jnp.float32):
        ks = jax.random.split(key, 8)
        self.is_transductive = is_transductive
        self.backbone_output_dim = backbone_output_dim
        self.d_model = d_model      # reference reads it from the Transformer
        self.max_classes = max_classes
        self.mxu_dtype = mxu_dtype
        C, D, M, NC = in_channels, backbone_output_dim, d_model, max_classes

        # logical (PyTorch-layout) parameters
        self.conv_w = 0.1 * jax.random.normal(ks[0], (D, C, 3, 3), jnp.float32)
        self.conv_b = 0.1 * jax.random.normal(ks[1], (D,), jnp.float32)
        self.fc_in_w = 0.1 * jax.random.normal(ks[2], (D, M), jnp.float32)
        self.fc_in_b = 0.1 * jax.random.normal(ks[3], (M,), jnp.float32)
        self.fc_out_w = 0.1 * jax.random.normal(ks[4], (M, NC), jnp.float32)
        self.fc_out_b = 0.1 * jax.random.normal(ks[5], (NC,), jnp.float32)
        self.fc_mem_w = 0.1 * jax.random.normal(ks[6], (M, NC), jnp.float32)
        self.fc_mem_b = 0.1 * jax.random.normal(ks[7], (NC,), jnp.float32)
        self.bn_src_gamma = jnp.ones((M,), jnp.float32)
        self.bn_src_beta = jnp.zeros((M,), jnp.float32)
        self.bn_tgt_gamma = jnp.ones((M,), jnp.float32)
        self.bn_tgt_beta = jnp.zeros((M,), jnp.float32)

        # ---- pre-packed, lane-dense kernel operands (zero padding keeps the
        # padded rows/columns exactly 0, so slicing them off is lossless) ----
        Kp = _round_up(9 * C, LANE)           # im2col K: 36 -> 128
        Dp = _round_up(D, LANE)               # conv out: 32 -> 128
        NCp = _round_up(NC, LANE)             # classes: 100 -> 128
        self._k_pad, self._d_pad, self._nc_pad = Kp, Dp, NCp

        # conv weights: OIHW -> tap-major [9*C, D], padded to [Kp, Dp]
        w_mat = jnp.transpose(self.conv_w, (2, 3, 1, 0)).reshape(9 * C, D)
        self._conv_w_mat = jnp.pad(
            w_mat, ((0, Kp - 9 * C), (0, Dp - D))).astype(mxu_dtype)
        self._conv_b_pad = jnp.pad(self.conv_b, (0, Dp - D)).reshape(1, Dp)

        # transform operands: 5 packed arrays (was 12 separate DMAs)
        self._fc_in_w = self.fc_in_w.astype(mxu_dtype)
        self._vec_m = jnp.stack([self.fc_in_b,
                                 self.bn_src_gamma, self.bn_src_beta,
                                 self.bn_tgt_gamma, self.bn_tgt_beta], axis=0)
        self._w_cat = jnp.concatenate(
            [jnp.pad(self.fc_mem_w, ((0, 0), (0, NCp - NC))),
             jnp.pad(self.fc_out_w, ((0, 0), (0, NCp - NC)))],
            axis=1).astype(mxu_dtype)                        # [M, 2*NCp]
        self._b_cat = jnp.concatenate(
            [jnp.pad(self.fc_mem_b, (0, NCp - NC)),
             jnp.pad(self.fc_out_b, (0, NCp - NC))]).reshape(1, 2 * NCp)

    # ----------------------------------------------------------- forward ----

    def forward(self, x_nchw):
        B, C, H, W = x_nchw.shape
        hw = H * W
        Kp, Dp = self._k_pad, self._d_pad

        # wrapper-side im2col: one lane-dense [B*H*W, 128] slab in HBM
        # (layout plumbing in XLA; replaces the 4/128-lane-sparse NHWC DMA).
        x_pad = jnp.pad(jnp.transpose(x_nchw, (0, 2, 3, 1)),
                        ((0, 0), (1, 1), (1, 1), (0, 0)))
        taps = [x_pad[:, kh:kh + H, kw:kw + W, :]
                for kh in range(3) for kw in range(3)]
        patches = jnp.concatenate(taps, axis=-1).reshape(B * hw, 9 * C)
        patches = jnp.pad(patches, ((0, 0), (0, Kp - 9 * C))).astype(self.mxu_dtype)

        # 128-row tiles keep the live activation ~16 vregs; grid b-axis is
        # "parallel" (megacore / v7x 2-TC), row axis is the GAP reduction.
        tile = 128 if hw % 128 == 0 else hw  # TODO(synk): pad rows for ragged H*W
        n_rt = hw // tile

        pooled = pl.pallas_call(
            functools.partial(_conv_relu_gap_kernel, 1.0 / hw),
            out_shape=jax.ShapeDtypeStruct((B, 1, Dp), jnp.float32),
            grid=(B, n_rt),
            in_specs=[
                pl.BlockSpec((tile, Kp), lambda b, r: (b * n_rt + r, 0)),
                pl.BlockSpec((Kp, Dp), lambda b, r: (0, 0)),
                pl.BlockSpec((1, Dp), lambda b, r: (0, 0)),
            ],
            out_specs=pl.BlockSpec((1, 1, Dp), lambda b, r: (b, 0, 0)),
            compiler_params=pltpu.CompilerParams(
                dimension_semantics=("parallel", "arbitrary"),
                vmem_limit_bytes=32 * 1024 * 1024),
        )(patches, self._conv_w_mat, self._conv_b_pad)

        feats = pooled.reshape(B, Dp)[:, :self.backbone_output_dim]
        return feats.astype(x_nchw.dtype)

    # --------------------------------------------------------- transform ----

    def transform(self, support, support_classes, query):
        del support_classes  # unused in the reference transform() as well
        B, ns, F = support.shape
        _, nq, _ = query.shape
        n_src, n_tgt = B * ns, B * nq
        NCp = self._nc_pad

        # one row slab -> single fc_transformer_in matmul inside the kernel
        rows = jnp.concatenate([support.reshape(n_src, F),
                                query.reshape(n_tgt, F)],
                               axis=0).astype(self.mxu_dtype)

        outcat = pl.pallas_call(
            functools.partial(_transform_fused_kernel, n_src, n_tgt, 1e-5),
            out_shape=jax.ShapeDtypeStruct((n_src + n_tgt, 2 * NCp), jnp.float32),
            in_specs=[_vmem_spec()] * 5,
            out_specs=_vmem_spec(),
        )(rows, self._fc_in_w, self._vec_m, self._w_cat, self._b_cat)

        NC = self.max_classes
        mem = outcat[:n_src, :NC].reshape(B, ns, NC)
        out = outcat[n_src:, NCp:NCp + NC].reshape(B, nq, NC)
        return mem, out


# --------------------------------------------------------------------- main --

if __name__ == "__main__":
    key = jax.random.PRNGKey(0)
    k_model, k_x, k_sup, k_qry = jax.random.split(key, 4)

    model = FewShotTransformerPallas(k_model, in_channels=4,
                                     backbone_output_dim=32, d_model=64,
                                     max_classes=100)

    # forward() == backbone(x), NCHW input like PyTorch.
    x = jax.random.normal(k_x, (2, 4, 16, 16), jnp.float32)
    feats = model.forward(x)                                     # [2, 32]

    # correctness check of the fused conv kernel against XLA conv
    ref = jax.lax.conv_general_dilated(
        x, model.conv_w, window_strides=(1, 1), padding="SAME",
        dimension_numbers=("NCHW", "OIHW", "NCHW"))
    ref = jnp.maximum(ref + model.conv_b[None, :, None, None], 0.0).mean(axis=(2, 3))
    assert jnp.allclose(feats, ref, atol=1e-3, rtol=1e-3), "conv kernel mismatch"

    # transform(): support/query are backbone features [batch, seq, feat_dim]
    support = jax.random.normal(k_sup, (2, 5, 32), jnp.float32)
    query = jax.random.normal(k_qry, (2, 8, 32), jnp.float32)
    support_classes = jnp.zeros((2, 5), jnp.int32)
    mem_logits, out_logits = model.transform(support, support_classes, query)

    # correctness check of the fused transform kernel against plain jnp
    def bn_ref(v, g, b):
        m = v.mean(0, keepdims=True)
        var = ((v - m) ** 2).mean(0, keepdims=True)
        return (v - m) / jnp.sqrt(var + 1e-5) * g + b

    src_r = support.reshape(-1, 32) @ model.fc_in_w + model.fc_in_b
    tgt_r = query.reshape(-1, 32) @ model.fc_in_w + model.fc_in_b
    src_r = bn_ref(src_r, model.bn_src_gamma, model.bn_src_beta)
    tgt_r = bn_ref(tgt_r, model.bn_tgt_gamma, model.bn_tgt_beta)
    mem_r = (src_r @ model.fc_mem_w + model.fc_mem_b).reshape(2, 5, 100)
    out_r = (tgt_r @ model.fc_out_w + model.fc_out_b).reshape(2, 8, 100)
    assert jnp.allclose(mem_logits, mem_r, atol=1e-2, rtol=1e-2), "memory mismatch"
    assert jnp.allclose(out_logits, out_r, atol=1e-2, rtol=1e-2), "output mismatch"

    jax.block_until_ready((feats, mem_logits, out_logits))
    assert feats.shape == (2, 32)
    assert mem_logits.shape == (2, 5, 100) and out_logits.shape == (2, 8, 100)
    print("KERNEL_OK")
</pallas_src>

<mosaic_0001>
module attributes {stable_mosaic.version = 11 : i64} {
  func.func @_conv_relu_gap_kernel(%arg0: i32, %arg1: i32, %arg2: memref<128x128xf32, #tpu.memory_space<vmem>>, %arg3: memref<128x128xf32, #tpu.memory_space<vmem>>, %arg4: memref<1x128xf32, #tpu.memory_space<vmem>>, %arg5: memref<1x1x128xf32, #tpu.memory_space<vmem>>) attributes {dimension_semantics = [#tpu.dimension_semantics<parallel>, #tpu.dimension_semantics<arbitrary>], iteration_bounds = array<i64: 2, 2>, scalar_prefetch = 0 : i64, scratch_operands = 0 : i64, tpu.core_type = #tpu.core_type<tc>, window_params = [{transform_indices = @transform_0, window_bounds = array<i64: 128, 128>}, {pipeline_mode = #tpu.pipeline_mode<synchronous>, transform_indices = @transform_1, window_bounds = array<i64: 128, 128>}, {pipeline_mode = #tpu.pipeline_mode<synchronous>, transform_indices = @transform_2, window_bounds = array<i64: 1, 128>}, {transform_indices = @transform_3, window_bounds = array<i64: 1, 1, 128>}]} {
    %c0_i32 = arith.constant 0 : i32
    %0 = arith.cmpi eq, %arg1, %c0_i32 : i32
    %1 = arith.extui %0 : i1 to i32
    %c0_i32_0 = arith.constant 0 : i32
    %2 = arith.cmpi ne, %1, %c0_i32_0 : i32
    scf.if %2 {
      %cst_15 = arith.constant 0.000000e+00 : f32
      %20 = vector.broadcast %cst_15 : f32 to vector<1x1x128xf32>
      %c0_16 = arith.constant 0 : index
      %c0_17 = arith.constant 0 : index
      %c0_18 = arith.constant 0 : index
      %21 = vector.load %arg5[%c0_16, %c0_17, %c0_18] : memref<1x1x128xf32, #tpu.memory_space<vmem>>, vector<1x1x128xf32>
      tpu.vector_store %arg5[%c0_16, %c0_17, %c0_18], %20 {strides = array<i32>} : memref<1x1x128xf32, #tpu.memory_space<vmem>>, vector<1x1x128xf32>,
    } else {
    }
    %c0 = arith.constant 0 : index
    %c0_1 = arith.constant 0 : index
    %3 = vector.load %arg2[%c0, %c0_1] : memref<128x128xf32, #tpu.memory_space<vmem>>, vector<128x128xf32>
    %c0_2 = arith.constant 0 : index
    %c0_3 = arith.constant 0 : index
    %4 = vector.load %arg3[%c0_2, %c0_3] : memref<128x128xf32, #tpu.memory_space<vmem>>, vector<128x128xf32>
    %cst = arith.constant dense<0.000000e+00> : vector<128x128xf32>
    %5 = tpu.matmul %3, %4, %cst {dimension_numbers = #tpu.dot_dimension_numbers<[1], [0], [0], [1], [0, 0, 1, 1], [], []>} : vector<128x128xf32>, vector<128x128xf32>, vector<128x128xf32> -> vector<128x128xf32>
    %c0_4 = arith.constant 0 : index
    %c0_5 = arith.constant 0 : index
    %6 = vector.load %arg4[%c0_4, %c0_5] : memref<1x128xf32, #tpu.memory_space<vmem>>, vector<1x128xf32>
    %7 = vector.broadcast %6 : vector<1x128xf32> to vector<128x128xf32>
    %8 = arith.addf %5, %7 : vector<128x128xf32>
    %cst_6 = arith.constant 0.000000e+00 : f32
    %9 = vector.broadcast %cst_6 : f32 to vector<128x128xf32>
    %10 = arith.maximumf %8, %9 : vector<128x128xf32>
    %c0_7 = arith.constant 0 : index
    %c0_8 = arith.constant 0 : index
    %c0_9 = arith.constant 0 : index
    %11 = vector.load %arg5[%c0_7, %c0_8, %c0_9] : memref<1x1x128xf32, #tpu.memory_space<vmem>>, vector<1x1x128xf32>
    %cst_10 = arith.constant dense<0.000000e+00> : vector<128xf32>
    %12 = vector.multi_reduction <add>, %10, %cst_10 [0] : vector<128x128xf32> to vector<128xf32>
    %13 = vector.shape_cast %12 : vector<128xf32> to vector<1x128xf32>
    %14 = vector.shape_cast %13 : vector<1x128xf32> to vector<1x1x128xf32>
    %15 = arith.addf %11, %14 : vector<1x1x128xf32>
    %c0_11 = arith.constant 0 : index
    %c0_12 = arith.constant 0 : index
    %c0_13 = arith.constant 0 : index
    %16 = vector.load %arg5[%c0_11, %c0_12, %c0_13] : memref<1x1x128xf32, #tpu.memory_space<vmem>>, vector<1x1x128xf32>
    tpu.vector_store %arg5[%c0_11, %c0_12, %c0_13], %15 {strides = array<i32>} : memref<1x1x128xf32, #tpu.memory_space<vmem>>, vector<1x1x128xf32>,
    %c1_i32 = arith.constant 1 : i32
    %17 = arith.cmpi eq, %arg1, %c1_i32 : i32
    %18 = arith.extui %17 : i1 to i32
    %c0_i32_14 = arith.constant 0 : i32
    %19 = arith.cmpi ne, %18, %c0_i32_14 : i32
    scf.if %19 {
      %c0_15 = arith.constant 0 : index
      %c0_16 = arith.constant 0 : index
      %c0_17 = arith.constant 0 : index
      %20 = vector.load %arg5[%c0_15, %c0_16, %c0_17] : memref<1x1x128xf32, #tpu.memory_space<vmem>>, vector<1x1x128xf32>
      %cst_18 = arith.constant 3.906250e-03 : f32
      %21 = vector.broadcast %cst_18 : f32 to vector<1x1x128xf32>
      %22 = arith.mulf %20, %21 : vector<1x1x128xf32>
      %c0_19 = arith.constant 0 : index
      %c0_20 = arith.constant 0 : index
      %c0_21 = arith.constant 0 : index
      %23 = vector.load %arg5[%c0_19, %c0_20, %c0_21] : memref<1x1x128xf32, #tpu.memory_space<vmem>>, vector<1x1x128xf32>
      tpu.vector_store %arg5[%c0_19, %c0_20, %c0_21], %22 {strides = array<i32>} : memref<1x1x128xf32, #tpu.memory_space<vmem>>, vector<1x1x128xf32>,
    } else {
    }
    return
  }
  func.func @transform_0(%arg0: i32, %arg1: i32) -> (i32, i32) {
    %c2_i32 = arith.constant 2 : i32
    %0 = arith.muli %arg0, %c2_i32 : i32
    %1 = arith.addi %0, %arg1 : i32
    %c0_i32 = arith.constant 0 : i32
    %c0_i32_0 = arith.constant 0 : i32
    return %1, %c0_i32 : i32, i32
  }
  func.func @transform_1(%arg0: i32, %arg1: i32) -> (i32, i32) {
    %c0_i32 = arith.constant 0 : i32
    %c0_i32_0 = arith.constant 0 : i32
    %c0_i32_1 = arith.constant 0 : i32
    return %c0_i32, %c0_i32_0 : i32, i32
  }
  func.func @transform_2(%arg0: i32, %arg1: i32) -> (i32, i32) {
    %c0_i32 = arith.constant 0 : i32
    %c0_i32_0 = arith.constant 0 : i32
    %c0_i32_1 = arith.constant 0 : i32
    return %c0_i32, %c0_i32_0 : i32, i32
  }
  func.func @transform_3(%arg0: i32, %arg1: i32) -> (i32, i32, i32) {
    %c0_i32 = arith.constant 0 : i32
    %c0_i32_0 = arith.constant 0 : i32
    %c0_i32_1 = arith.constant 0 : i32
    return %arg0, %c0_i32, %c0_i32_0 : i32, i32, i32
  }
}

</mosaic_0001>

<llo_original>
// kernel: tpu_custom_call.1
$region0: #{tpu_custom_call.1}
  #allocation0 [shape = 'u32[]', space=smem, size = 0x4, offset = 0x4, fixed_abs, tag = 'smem constant byte address 0x4 - core index']
  #allocation1 [shape = 'u32[144,128]{1,0:T(1,128)}', space=vmem, size = 0x12000, scoped, tag = 'internal scratch']
  %s0 = inlined_call_operand.hbm [shape: f32[512,128], index: 0, kind: input, shape index: {}]
  %s1 = inlined_call_operand.hbm [shape: f32[128,128], index: 1, kind: input, shape index: {}]
  %s2 = inlined_call_operand.vmem [shape: f32[1,128], index: 2, kind: input, shape index: {}]
  %s3 = inlined_call_operand.hbm [shape: f32[2,1,128], index: 3, kind: output, shape index: {}]
  %s4 = sld [smem:[#allocation0]]
  $region61: #{tpu_custom_call.1} parent=0
    _
  %s6 = ssub.s32 1, %s4
  %s7 = scalar_select 0, %s6, %s4
  $region1: #{tpu_custom_call.1} parent=0
    #allocation2 [shape = 'u8[131072]{0}', space=vmem, size = 0x20000, scoped, tag = 'input window, operand 0']
    #allocation3 [shape = 's32[2]{0}', space=sflag, size = 0x8, scoped, tag = 'scoped memory for tpu_custom_call.1']
    #allocation4 [shape = 's32[2]{0}', space=sflag, size = 0x8, scoped, tag = 'scoped memory for tpu_custom_call.1']
    #allocation5 [shape = 'u8[65536]{0}', space=vmem, size = 0x10000, scoped, tag = 'input window, operand 1, single buffered']
    #allocation6 [shape = 's32[1]{0}', space=sflag, size = 0x4, scoped, tag = 'scoped memory for tpu_custom_call.1']
    #allocation7 [shape = 'u8[1024]{0}', space=vmem, size = 0x400, scoped, tag = 'output window, operand 0']
    %8 = vsyncpa [#allocation3], 0
    %s9 = scalar_lea.sflag [#allocation3], 1
    %10 = vsyncpa %s9, 0
    %11 = vsyncpa [#allocation6], 0
    %12 = vsyncpa [#allocation4], 0
    %s13 = scalar_lea.sflag [#allocation4], 1
    %14 = vsyncpa %s13, 0
    loop: start=0, step=1, limit=6
    $region2: #{tpu_custom_call.1} parent=1 // loop_pre_header
      _
    $region3: #{tpu_custom_call.1} parent=1 // loop_header
      %s16 = sphi 0, %s20
      %p17 = scmp.ge.s32.totalorder %s16, 6
      %s23 = sphi 0, %s35
      %s24 = sphi 0, %s31
      %s25 = sphi 0, %s23
      %s26 = sphi 0, %s24
      %s27 = sphi 0, %s25
      %s28 = sphi 0, %s26
      %s42 = sphi 0, %s44
      %s45 = sphi 0, %s42
      %s46 = sphi 0, %s45
      %s62 = sphi 0, %s46
      %s66 = sphi 0, %s66
      %s68 = sphi 0, %s66
      %s69 = sphi 0, %s68
      %s83 = sphi 0, %s69
      %s87 = sphi 0, %s87
      %s89 = sphi 0, %s87
      %s90 = sphi 0, %s89
      %s104 = sphi 0, %s90
      %s110 = sphi 0, %s112
      %s113 = sphi 0, %s110
      %s114 = sphi 0, %s113
      %s130 = sphi 0, %s114
    $region4: #{tpu_custom_call.1} parent=1 // loop_header_branch
      %19 = sbr.rel (%p17) target = $region8
    $region5: #{tpu_custom_call.1} parent=1 // loop_body
      %s21 = ssub.s32 %s16, 1
      %s22 = ssub.s32 %s16, 2
      %s29 = sadd.s32 1, %s24
      %p30 = scmp.ge.s32.totalorder %s29, 2
      %s31 = scalar_select %p30, 0, %s29
      %s32 = sadd.s32 1, %s23
      %s33 = scalar_select %p30, %s32, %s23
      %p34 = scmp.ge.s32.totalorder %s33, 2
      %s35 = scalar_select %p34, 0, %s33
      %s36 = smul.u32 %s23, 2
      %s37 = sadd.s32 %s36, %s24
      %s38 = smul.u32 %s35, 2
      %s39 = sadd.s32 %s38, %s31
      %s40 = ssub.s32 %s37, %s39
      %p41 = scmp.eq.s32.totalorder %s40, 0
      %s43 = sadd.s32 %s42, 1
      %s44 = scalar_select %p41, %s42, %s43
      %p47 = pneg %p41
      %p48 = scmp.eq.s32.totalorder %s16, 3
      %p49 = por %p47, %p48
      %p50 = scmp.ne.s32.totalorder %s42, %s45
      %p51 = scmp.eq.s32.totalorder %s16, 0
      %p52 = por %p50, %p51
      %p53 = scmp.ne.s32.totalorder %s42, %s45
      %p54 = scmp.eq.s32.totalorder %s21, 3
      %p55 = por %p53, %p54
      %p56 = scmp.ne.s32.totalorder %s45, %s46
      %p57 = scmp.eq.s32.totalorder %s21, 0
      %p58 = por %p56, %p57
      %p59 = scmp.ne.s32.totalorder %s45, %s46
      %p60 = scmp.eq.s32.totalorder %s22, 3
      %p61 = por %p59, %p60
      %p63 = scmp.ne.s32.totalorder %s46, %s62
      %p64 = scmp.eq.s32.totalorder %s22, 0
      %p65 = por %p63, %p64
      %s67 = sadd.s32 %s66, 1
      %p70 = scmp.eq.s32.totalorder %s16, 3
      %p71 = scmp.ne.s32.totalorder %s66, %s68
      %p72 = scmp.eq.s32.totalorder %s16, 0
      %p73 = por %p71, %p72
      %p74 = scmp.ne.s32.totalorder %s66, %s68
      %p75 = scmp.eq.s32.totalorder %s21, 3
      %p76 = por %p74, %p75
      %p77 = scmp.ne.s32.totalorder %s68, %s69
      %p78 = scmp.eq.s32.totalorder %s21, 0
      %p79 = por %p77, %p78
      %p80 = scmp.ne.s32.totalorder %s68, %s69
      %p81 = scmp.eq.s32.totalorder %s22, 3
      %p82 = por %p80, %p81
      %p84 = scmp.ne.s32.totalorder %s69, %s83
      %p85 = scmp.eq.s32.totalorder %s22, 0
      %p86 = por %p84, %p85
      %s88 = sadd.s32 %s87, 1
      %p91 = scmp.eq.s32.totalorder %s16, 3
      %p92 = scmp.ne.s32.totalorder %s87, %s89
      %p93 = scmp.eq.s32.totalorder %s16, 0
      %p94 = por %p92, %p93
      %p95 = scmp.ne.s32.totalorder %s87, %s89
      %p96 = scmp.eq.s32.totalorder %s21, 3
      %p97 = por %p95, %p96
      %p98 = scmp.ne.s32.totalorder %s89, %s90
      %p99 = scmp.eq.s32.totalorder %s21, 0
      %p100 = por %p98, %p99
      %p101 = scmp.ne.s32.totalorder %s89, %s90
      %p102 = scmp.eq.s32.totalorder %s22, 3
      %p103 = por %p101, %p102
      %p105 = scmp.ne.s32.totalorder %s90, %s104
      %p106 = scmp.eq.s32.totalorder %s22, 0
      %p107 = por %p105, %p106
      %s108 = ssub.s32 %s23, %s35
      %p109 = scmp.eq.s32.totalorder %s108, 0
      %s111 = sadd.s32 %s110, 1
      %s112 = scalar_select %p109, %s110, %s111
      %p115 = pneg %p109
      %p116 = scmp.eq.s32.totalorder %s16, 3
      %p117 = por %p115, %p116
      %p118 = scmp.ne.s32.totalorder %s110, %s113
      %p119 = scmp.eq.s32.totalorder %s16, 0
      %p120 = por %p118, %p119
      %p121 = scmp.ne.s32.totalorder %s110, %s113
      %p122 = scmp.eq.s32.totalorder %s21, 3
      %p123 = por %p121, %p122
      %p124 = scmp.ne.s32.totalorder %s113, %s114
      %p125 = scmp.eq.s32.totalorder %s21, 0
      %p126 = por %p124, %p125
      %p127 = scmp.ne.s32.totalorder %s113, %s114
      %p128 = scmp.eq.s32.totalorder %s22, 3
      %p129 = por %p127, %p128
      %p131 = scmp.ne.s32.totalorder %s114, %s130
      %p132 = scmp.eq.s32.totalorder %s22, 0
      %p133 = por %p131, %p132
      %p134 = scmp.le.s32.totalorder 1, %s16
      %p135 = scmp.lt.s32.totalorder %s16, 5
      %p136 = pnand %p134, %p135
      %p137 = pneg %p136
      // Predicated region
      $region9: #{tpu_custom_call.1} parent=5 // pred_check
        _
      $region10: #{tpu_custom_call.1} parent=5 // pred_check_branch
        %139 = sbr.rel (%p136) target = $region12
      $region11: #{tpu_custom_call.1} parent=5 // pred_region
        %s140 = ssub.s32 %s16, 1
        // Predicated region
        $region13: #{tpu_custom_call.1} parent=11 // pred_check
          %p141 = pneg %p79
        $region14: #{tpu_custom_call.1} parent=11 // pred_check_branch
          %143 = sbr.rel (%p141) target = $region16
        $region15: #{tpu_custom_call.1} parent=11 // pred_region
          %s145 = ssub.s32 2048, 2048
          %146 = vsyncadd [#allocation6], %s145
          %s147 = sshll.u32 [#allocation5], 4
          %s148 = int_to_ptr.vmem [resolvable:$true] %s147
          %153 = dma.hbm_to_vmem [thread:$0]  %s1, 2048, %s148, [#allocation6], 128, 128, 8
        $region16: #{tpu_custom_call.1} parent=11 // pred_fallthru
          _
        // Predicated region
        $region17: #{tpu_custom_call.1} parent=11 // pred_check
          %p154 = pneg %p100
        $region18: #{tpu_custom_call.1} parent=11 // pred_check_branch
          %156 = sbr.rel (%p154) target = $region20
        $region19: #{tpu_custom_call.1} parent=11 // pred_region
          _
        $region20: #{tpu_custom_call.1} parent=11 // pred_fallthru
          _
      $region12: #{tpu_custom_call.1} parent=5 // pred_fallthru
        _
      %p157 = scmp.lt.s32.totalorder %s16, 4
      // Predicated region
      $region21: #{tpu_custom_call.1} parent=5 // pred_check
        %p158 = pneg %p157
      $region22: #{tpu_custom_call.1} parent=5 // pred_check_branch
        %160 = sbr.rel (%p158) target = $region24
      $region23: #{tpu_custom_call.1} parent=5 // pred_region
        // Predicated region
        $region25: #{tpu_custom_call.1} parent=23 // pred_check
          %p161 = pneg %p52
        $region26: #{tpu_custom_call.1} parent=23 // pred_check_branch
          %163 = sbr.rel (%p161) target = $region28
        $region27: #{tpu_custom_call.1} parent=23 // pred_region
          %s164 = sand.u32 %s42, 1
          %s165 = scalar_lea.sflag [#allocation3], %s164
          %s166 = sand.u32 %s42, 1
          %s167 = smul.addr %s166, 128
          %s168 = scalar_lea.vmem [#allocation2], %s167
          %s169 = smul.u32 %s23, 2
          %s170 = sadd.s32 %s169, %s24
          %s171 = smul.u32 16, %s170
          %s173 = ssub.s32 2048, 2048
          %174 = vsyncadd %s165, %s173
          %s175 = smul.addr %s171, 128
          %s176 = scalar_lea.hbm %s0, %s175
          %s177 = sshll.u32 %s168, 4
          %s178 = int_to_ptr.vmem [resolvable:$true] %s177
          %183 = dma.hbm_to_vmem [thread:$0]  %s176, 2048, %s178, %s165, 128, 128, 8
        $region28: #{tpu_custom_call.1} parent=23 // pred_fallthru
          _
      $region24: #{tpu_custom_call.1} parent=5 // pred_fallthru
        _
      %p184 = scmp.le.s32.totalorder 1, %s16
      %p185 = scmp.lt.s32.totalorder %s16, 5
      %p186 = pnand %p184, %p185
      %p187 = pneg %p186
      // Predicated region
      $region29: #{tpu_custom_call.1} parent=5 // pred_check
        _
      $region30: #{tpu_custom_call.1} parent=5 // pred_check_branch
        %189 = sbr.rel (%p186) target = $region32
      $region31: #{tpu_custom_call.1} parent=5 // pred_region
        %s190 = ssub.s32 %s16, 1
        %s191 = sand.u32 %s45, 1
        %s192 = scalar_lea.sflag [#allocation3], %s191
        %s193 = sand.u32 %s45, 1
        %s194 = smul.addr %s193, 128
        %s195 = scalar_lea.vmem [#allocation2], %s194
        // Predicated region
        $region33: #{tpu_custom_call.1} parent=31 // pred_check
          %p196 = pneg %p58
        $region34: #{tpu_custom_call.1} parent=31 // pred_check_branch
          %198 = sbr.rel (%p196) target = $region36
        $region35: #{tpu_custom_call.1} parent=31 // pred_region
          %199 = dma.done %s192, 2048
        $region36: #{tpu_custom_call.1} parent=31 // pred_fallthru
          _
        // Predicated region
        $region37: #{tpu_custom_call.1} parent=31 // pred_check
          %p200 = pneg %p79
        $region38: #{tpu_custom_call.1} parent=31 // pred_check_branch
          %202 = sbr.rel (%p200) target = $region40
        $region39: #{tpu_custom_call.1} parent=31 // pred_region
          %203 = dma.done [#allocation6], 2048
        $region40: #{tpu_custom_call.1} parent=31 // pred_fallthru
          _
        %s204 = sand.u32 %s45, 1
        %s205 = scalar_lea.sflag [#allocation3], %s204
        %s206 = sand.u32 %s45, 1
        %s207 = smul.addr %s206, 128
        %s208 = scalar_lea.vmem [#allocation2], %s207
        %p209 = pneg %p58
        %p210 = pneg %p55
        %p211 = pneg %p79
        %p212 = pneg %p76
        %p213 = pneg %p100
        %p214 = pneg %p97
        %p215 = pneg %p126
        %p216 = pneg %p123
        %s217 = sand.u32 %s113, 1
        %s218 = scalar_lea.sflag [#allocation4], %s217
        %s219 = sand.u32 %s113, 1
        %s220 = scalar_lea.vmem [#allocation7], %s219
        %s221 = smul.u32 %s25, 2
        %s222 = sadd.s32 %s221, %s26
        %s223 = smul.u32 16, %s222
        %p224 = scmp.eq.s32.totalorder %s26, 0
        // Predicated region
        $region41: #{tpu_custom_call.1} parent=31 // pred_check
          %p225 = pneg %p224
        $region42: #{tpu_custom_call.1} parent=31 // pred_check_branch
          %227 = sbr.rel (%p225) target = $region44
        $region43: #{tpu_custom_call.1} parent=31 // pred_region
          %228 = vst [vmem:[%s220] sm:$0x1] 0.0
        $region44: #{tpu_custom_call.1} parent=31 // pred_fallthru
          _
        %v229 = vld [vmem:[%s195] sm:$0xff]
        %v230 = vld [vmem:[%s195 + $0x8] sm:$0xff]
        %v231 = vld [vmem:[%s195 + $0x10] sm:$0xff]
        %v232 = vld [vmem:[%s195 + $0x18] sm:$0xff]
        %v233 = vld [vmem:[%s195 + $0x20] sm:$0xff]
        %v234 = vld [vmem:[%s195 + $0x28] sm:$0xff]
        %v235 = vld [vmem:[%s195 + $0x30] sm:$0xff]
        %v236 = vld [vmem:[%s195 + $0x38] sm:$0xff]
        %v237 = vld [vmem:[%s195 + $0x40] sm:$0xff]
        %v238 = vld [vmem:[%s195 + $0x48] sm:$0xff]
        %v239 = vld [vmem:[%s195 + $0x50] sm:$0xff]
        %v240 = vld [vmem:[%s195 + $0x58] sm:$0xff]
        %v241 = vld [vmem:[%s195 + $0x60] sm:$0xff]
        %v242 = vld [vmem:[%s195 + $0x68] sm:$0xff]
        %v243 = vld [vmem:[%s195 + $0x70] sm:$0xff]
        %v244 = vld [vmem:[%s195 + $0x78] sm:$0xff]
        %v245 = vld [vmem:[#allocation5] sm:$0xff]
        %v246 = vld [vmem:[#allocation5 + $0x8] sm:$0xff]
        %v247 = vld [vmem:[#allocation5 + $0x10] sm:$0xff]
        %v248 = vld [vmem:[#allocation5 + $0x18] sm:$0xff]
        %v249 = vld [vmem:[#allocation5 + $0x20] sm:$0xff]
        %v250 = vld [vmem:[#allocation5 + $0x28] sm:$0xff]
        %v251 = vld [vmem:[#allocation5 + $0x30] sm:$0xff]
        %v252 = vld [vmem:[#allocation5 + $0x38] sm:$0xff]
        %v253 = vld [vmem:[#allocation5 + $0x40] sm:$0xff]
        %v254 = vld [vmem:[#allocation5 + $0x48] sm:$0xff]
        %v255 = vld [vmem:[#allocation5 + $0x50] sm:$0xff]
        %v256 = vld [vmem:[#allocation5 + $0x58] sm:$0xff]
        %v257 = vld [vmem:[#allocation5 + $0x60] sm:$0xff]
        %v258 = vld [vmem:[#allocation5 + $0x68] sm:$0xff]
        %v259 = vld [vmem:[#allocation5 + $0x70] sm:$0xff]
        %v260 = vld [vmem:[#allocation5 + $0x78] sm:$0xff]
        %v261 = vld [vmem:[%s2] sm:$0x1]
        %v263 = vlaneseq
        %v264 = vshrl.u32 %v263, 7
        %v265 = vsub.s32 0, %v264
        %v266 = vrot.slane %v261, %v265
        %268 = vmatprep.subr.mxu0 0.0
        %269 = vmatpush1.msra.mxu0 %v245
        %270 = vmatprep.subr.mxu0 0.0
        %271 = vmatpush1.msra.mxu0 %v246
        %272 = vmatprep.subr.mxu0 0.0
        %273 = vmatpush1.msra.mxu0 %v247
        %274 = vmatprep.subr.mxu0 0.0
        %275 = vmatpush1.msra.mxu0 %v248
        %276 = vmatprep.subr.mxu0 0.0
        %277 = vmatpush1.msra.mxu0 %v249
        %278 = vmatprep.subr.mxu0 0.0
        %279 = vmatpush1.msra.mxu0 %v250
        %280 = vmatprep.subr.mxu0 0.0
        %281 = vmatpush1.msra.mxu0 %v251
        %282 = vmatprep.subr.mxu0 0.0
        %283 = vmatpush1.msra.mxu0 %v252
        %284 = vmatprep.subr.mxu0 0.0
        %285 = vmatpush1.msra.mxu0 %v253
        %286 = vmatprep.subr.mxu0 0.0
        %287 = vmatpush1.msra.mxu0 %v254
        %288 = vmatprep.subr.mxu0 0.0
        %289 = vmatpush1.msra.mxu0 %v255
        %290 = vmatprep.subr.mxu0 0.0
        %291 = vmatpush1.msra.mxu0 %v256
        %292 = vmatprep.subr.mxu0 0.0
        %293 = vmatpush1.msra.mxu0 %v257
        %294 = vmatprep.subr.mxu0 0.0
        %295 = vmatpush1.msra.mxu0 %v258
        %296 = vmatprep.subr.mxu0 0.0
        %297 = vmatpush1.msra.mxu0 %v259
        %298 = vmatprep.subr.mxu0 0.0
        %299 = vmatpush1.msra.mxu0 %v260
        %300 = vmatprep.subr.mxu0 0.0
        %301 = vmatpush1.msra.mxu0 0.0
        %302 = vmatprep.subr.mxu0 0.0
        %303 = vmatpush1.msra.mxu0 0.0
        %304 = vmatprep.subr.mxu0 0.0
        %305 = vmatpush1.msra.mxu0 0.0
        %306 = vmatprep.subr.mxu0 0.0
        %307 = vmatpush1.msra.mxu0 0.0
        %308 = vmatprep.subr.mxu0 0.0
        %309 = vmatpush1.msra.mxu0 0.0
        %310 = vmatprep.subr.mxu0 0.0
        %311 = vmatpush1.msra.mxu0 0.0
        %312 = vmatprep.subr.mxu0 0.0
        %313 = vmatpush1.msra.mxu0 0.0
        %314 = vmatprep.subr.mxu0 0.0
        %315 = vmatpush1.msra.mxu0 0.0
        %316 = vmatprep.subr.mxu0 0.0
        %317 = vmatpush1.msra.mxu0 0.0
        %318 = vmatprep.subr.mxu0 0.0
        %319 = vmatpush1.msra.mxu0 0.0
        %320 = vmatprep.subr.mxu0 0.0
        %321 = vmatpush1.msra.mxu0 0.0
        %322 = vmatprep.subr.mxu0 0.0
        %323 = vmatpush1.msra.mxu0 0.0
        %324 = vmatprep.subr.mxu0 0.0
        %325 = vmatpush1.msra.mxu0 0.0
        %326 = vmatprep.subr.mxu0 0.0
        %327 = vmatpush1.msra.mxu0 0.0
        %328 = vmatprep.subr.mxu0 0.0
        %329 = vmatpush1.msra.mxu0 0.0
        %330 = vmatprep.subr.mxu0 0.0
        %331 = vmatpush1.msra.mxu0 0.0
        %332 = vmatprep.mubr.f32.mxu0 0.0
        %333 = vmatmul.mubr.f32.gmra.mrb[0].mxu0 %v229
        %v334 = vpop.f32.mrb[0].mxu0
        %v335 = vadd.f32 %v266, %v334
        %v336 = vpop.f32.mrb[0].mxu0
        %337 = vmatprep.mubr.f32.mxu0 0.0
        %338 = vmatmul.mubr.f32.gmra.mrb[0].mxu0 %v230
        %v339 = vpop.f32.mrb[0].mxu0
        %v340 = vadd.f32 %v266, %v339
        %v341 = vpop.f32.mrb[0].mxu0
        %342 = vmatprep.mubr.f32.mxu0 0.0
        %343 = vmatmul.mubr.f32.gmra.mrb[0].mxu0 %v231
        %v344 = vpop.f32.mrb[0].mxu0
        %v345 = vadd.f32 %v266, %v344
        %v346 = vpop.f32.mrb[0].mxu0
        %347 = vmatprep.mubr.f32.mxu0 0.0
        %348 = vmatmul.mubr.f32.gmra.mrb[0].mxu0 %v232
        %v349 = vpop.f32.mrb[0].mxu0
        %v350 = vadd.f32 %v266, %v349
        %v351 = vpop.f32.mrb[0].mxu0
        %352 = vmatprep.mubr.f32.mxu0 0.0
        %353 = vmatmul.mubr.f32.gmra.mrb[0].mxu0 %v233
        %v354 = vpop.f32.mrb[0].mxu0
        %v355 = vadd.f32 %v266, %v354
        %v356 = vpop.f32.mrb[0].mxu0
        %357 = vmatprep.mubr.f32.mxu0 0.0
        %358 = vmatmul.mubr.f32.gmra.mrb[0].mxu0 %v234
        %v359 = vpop.f32.mrb[0].mxu0
        %v360 = vadd.f32 %v266, %v359
        %v361 = vpop.f32.mrb[0].mxu0
        %362 = vmatprep.mubr.f32.mxu0 0.0
        %363 = vmatmul.mubr.f32.gmra.mrb[0].mxu0 %v235
        %v364 = vpop.f32.mrb[0].mxu0
        %v365 = vadd.f32 %v266, %v364
        %v366 = vpop.f32.mrb[0].mxu0
        %367 = vmatprep.mubr.f32.mxu0 0.0
        %368 = vmatmul.mubr.f32.gmra.mrb[0].mxu0 %v236
        %v369 = vpop.f32.mrb[0].mxu0
        %v370 = vadd.f32 %v266, %v369
        %v371 = vpop.f32.mrb[0].mxu0
        %372 = vmatprep.mubr.f32.mxu0 0.0
        %373 = vmatmul.mubr.f32.gmra.mrb[0].mxu0 %v237
        %v374 = vpop.f32.mrb[0].mxu0
        %v375 = vadd.f32 %v266, %v374
        %v376 = vpop.f32.mrb[0].mxu0
        %377 = vmatprep.mubr.f32.mxu0 0.0
        %378 = vmatmul.mubr.f32.gmra.mrb[0].mxu0 %v238
        %v379 = vpop.f32.mrb[0].mxu0
        %v380 = vadd.f32 %v266, %v379
        %v381 = vpop.f32.mrb[0].mxu0
        %382 = vmatprep.mubr.f32.mxu0 0.0
        %383 = vmatmul.mubr.f32.gmra.mrb[0].mxu0 %v239
        %v384 = vpop.f32.mrb[0].mxu0
        %v385 = vadd.f32 %v266, %v384
        %v386 = vpop.f32.mrb[0].mxu0
        %387 = vmatprep.mubr.f32.mxu0 0.0
        %388 = vmatmul.mubr.f32.gmra.mrb[0].mxu0 %v240
        %v389 = vpop.f32.mrb[0].mxu0
        %v390 = vadd.f32 %v266, %v389
        %v391 = vpop.f32.mrb[0].mxu0
        %392 = vmatprep.mubr.f32.mxu0 0.0
        %393 = vmatmul.mubr.f32.gmra.mrb[0].mxu0 %v241
        %v394 = vpop.f32.mrb[0].mxu0
        %v395 = vadd.f32 %v266, %v394
        %v396 = vpop.f32.mrb[0].mxu0
        %397 = vmatprep.mubr.f32.mxu0 0.0
        %398 = vmatmul.mubr.f32.gmra.mrb[0].mxu0 %v242
        %v399 = vpop.f32.mrb[0].mxu0
        %v400 = vadd.f32 %v266, %v399
        %v401 = vpop.f32.mrb[0].mxu0
        %402 = vmatprep.mubr.f32.mxu0 0.0
        %403 = vmatmul.mubr.f32.gmra.mrb[0].mxu0 %v243
        %v404 = vpop.f32.mrb[0].mxu0
        %v405 = vadd.f32 %v266, %v404
        %v406 = vpop.f32.mrb[0].mxu0
        %407 = vmatprep.mubr.f32.mxu0 0.0
        %408 = vmatmul.mubr.f32.gmra.mrb[0].mxu0 %v244
        %v409 = vpop.f32.mrb[0].mxu0
        %v410 = vadd.f32 %v266, %v409
        %v411 = vpop.f32.mrb[0].mxu0
        %412 = vdwg.mxu0
        %v413 = vmax.f32 %v335, 0.0
        %v414 = vmax.f32 %v340, 0.0
        %v415 = vmax.f32 %v345, 0.0
        %v416 = vmax.f32 %v350, 0.0
        %v417 = vmax.f32 %v355, 0.0
        %v418 = vmax.f32 %v360, 0.0
        %v419 = vmax.f32 %v365, 0.0
        %v420 = vmax.f32 %v370, 0.0
        %v421 = vmax.f32 %v375, 0.0
        %v422 = vmax.f32 %v380, 0.0
        %v423 = vmax.f32 %v385, 0.0
        %v424 = vmax.f32 %v390, 0.0
        %v425 = vmax.f32 %v395, 0.0
        %v426 = vmax.f32 %v400, 0.0
        %v427 = vmax.f32 %v405, 0.0
        %v428 = vmax.f32 %v410, 0.0
        %v429 = vld [vmem:[%s220] sm:$0x1]
        %v430 = vadd.f32 %v413, %v414
        %v431 = vadd.f32 %v430, %v415
        %v432 = vadd.f32 %v431, %v416
        %v433 = vadd.f32 %v432, %v417
        %v434 = vadd.f32 %v433, %v418
        %v435 = vadd.f32 %v434, %v419
        %v436 = vadd.f32 %v435, %v420
        %v437 = vadd.f32 %v436, %v421
        %v438 = vadd.f32 %v437, %v422
        %v439 = vadd.f32 %v438, %v423
        %v440 = vadd.f32 %v439, %v424
        %v441 = vadd.f32 %v440, %v425
        %v442 = vadd.f32 %v441, %v426
        %v443 = vadd.f32 %v442, %v427
        %v444 = vadd.f32 %v443, %v428
        %v445 = vrot.slane %v444, 4
        %v446 = vadd.f32 %v444, %v445
        %v447 = vrot.slane %v446, 2
        %v448 = vadd.f32 %v446, %v447
        %v449 = vrot.slane %v448, 1
        %v450 = vadd.f32 %v448, %v449
        %v451 = vadd.f32 %v429, %v450
        %452 = vst [vmem:[%s220] sm:$0x1] %v451
        %p453 = scmp.eq.s32.totalorder %s26, 1
        // Predicated region
        $region45: #{tpu_custom_call.1} parent=31 // pred_check
          %p454 = pneg %p453
        $region46: #{tpu_custom_call.1} parent=31 // pred_check_branch
          %456 = sbr.rel (%p454) target = $region48
        $region47: #{tpu_custom_call.1} parent=31 // pred_region
          %v457 = vld [vmem:[%s220] sm:$0x1]
          %v458 = vmul.f32 %v457, 0.00390625
          %459 = vst [vmem:[%s220] sm:$0x1] %v458
        $region48: #{tpu_custom_call.1} parent=31 // pred_fallthru
          _
        %s460 = sand.u32 %s113, 1
        %s461 = scalar_lea.sflag [#allocation4], %s460
        %s462 = sand.u32 %s113, 1
        %s463 = scalar_lea.vmem [#allocation7], %s462
        // Predicated region
        $region49: #{tpu_custom_call.1} parent=31 // pred_check
          %p464 = pneg %p123
        $region50: #{tpu_custom_call.1} parent=31 // pred_check_branch
          %466 = sbr.rel (%p464) target = $region52
        $region51: #{tpu_custom_call.1} parent=31 // pred_region
          %s468 = ssub.s32 16, 16
          %469 = vsyncadd %s461, %s468
          %s470 = smul.addr %s25, 16
          %s471 = scalar_lea.hbm %s3, %s470
          %s473 = sshll.u32 %s463, 4
          %s474 = int_to_ptr.vmem [resolvable:$true] %s473
          %476 = dma.vmem_to_hbm [thread:$0]  %s474, 16, %s471, %s461
        $region52: #{tpu_custom_call.1} parent=31 // pred_fallthru
          _
      $region32: #{tpu_custom_call.1} parent=5 // pred_fallthru
        _
      %p477 = scmp.le.s32.totalorder 2, %s16
      // Predicated region
      $region53: #{tpu_custom_call.1} parent=5 // pred_check
        %p478 = pneg %p477
      $region54: #{tpu_custom_call.1} parent=5 // pred_check_branch
        %480 = sbr.rel (%p478) target = $region56
      $region55: #{tpu_custom_call.1} parent=5 // pred_region
        %s481 = ssub.s32 %s16, 2
        // Predicated region
        $region57: #{tpu_custom_call.1} parent=55 // pred_check
          %p482 = pneg %p129
        $region58: #{tpu_custom_call.1} parent=55 // pred_check_branch
          %484 = sbr.rel (%p482) target = $region60
        $region59: #{tpu_custom_call.1} parent=55 // pred_region
          %s485 = sand.u32 %s114, 1
          %s486 = scalar_lea.sflag [#allocation4], %s485
          %s487 = sand.u32 %s114, 1
          %s488 = scalar_lea.vmem [#allocation7], %s487
          %489 = dma.done %s486, 16
        $region60: #{tpu_custom_call.1} parent=55 // pred_fallthru
          _
      $region56: #{tpu_custom_call.1} parent=5 // pred_fallthru
        _
    $region6: #{tpu_custom_call.1} parent=1 // loop_footer
      %s20 = sadd.s32 1, %s16
    $region7: #{tpu_custom_call.1} parent=1 // loop_footer_branch
      %15 = sbr.rel target = $region3
    $region8: #{tpu_custom_call.1} parent=1 // loop_exit
      _
    %490 = vsyncpa [#allocation3], 1
    %s491 = scalar_lea.sflag [#allocation3], 1
    %492 = vsyncpa %s491, 1
    %493 = vsyncpa [#allocation6], 1
    %494 = vsyncpa [#allocation4], 1
    %s495 = scalar_lea.sflag [#allocation4], 1
    %496 = vsyncpa %s495, 1

</llo_original>
